<compile_context>
chip_gen: v7x
topology: tpu7x:2x2x1
jax: 0.10.0
libtpu: 0.0.40
codegen_flags: <defaults>
</compile_context>

<pallas_src>
import functools

import jax
import jax.numpy as jnp
from jax import lax
from jax.experimental import pallas as pl
from jax.experimental.pallas import tpu as pltpu

# SMPL pose indices used by the default (use_full_body=False) branch.
_IDX = (55, 58, 12, 15)
_SIGN = (1.0, -1.0, -1.0, -1.0)
_SPINE1 = slice(9, 12)
_SPINE2 = slice(18, 21)
_SPINE3 = slice(27, 30)

# 4096 rows * 128 padded lanes * 4 B = 2 MiB / buffer -> 4 MiB double-buffered,
# comfortably inside every generation's default scoped-VMEM limit.
_MAX_TILE_B = 4096


def _pick_tile(batch):
    if batch <= _MAX_TILE_B:
        return batch            # single block == full array dims (always legal)
    return _MAX_TILE_B          # multiple of 8


def _base_full_row(x):
    """(exp(x * sign_row) - 1)^2 over the full row; unused lanes contribute 0."""
    lane = lax.broadcasted_iota(jnp.int32, x.shape, 1)
    pos = jnp.where(lane == _IDX[0], 1.0, 0.0)
    neg = jnp.where((lane == _IDX[1]) | (lane == _IDX[2]) | (lane == _IDX[3]),
                    1.0, 0.0)
    sign = pos - neg
    return (jnp.exp(x * sign) - 1.0) ** 2


def _spine_terms(x, w):
    s1 = x[:, _SPINE1]
    s2 = x[:, _SPINE2]
    s3 = x[:, _SPINE3]
    sp12 = (jnp.exp(jnp.maximum(-s1 * s2, 0.0)) - 1.0) ** 2 * w
    sp23 = (jnp.exp(jnp.maximum(-s2 * s3, 0.0)) - 1.0) ** 2 * w
    return sp12, sp23


def _make_sum_kernel(batch, tile_b, smooth_spine, smooth_spine_loss_weight):
    """Per-block partial-sum kernel for reduction in ('mean', 'sum')."""
    ragged = (batch % tile_b) != 0

    def kernel(x_ref, out_ref):
        x = x_ref[...].astype(jnp.float32)                      # (tile_b, P)
        base = _base_full_row(x)                                 # (tile_b, P)
        if ragged:
            row = (pl.program_id(0) * tile_b
                   + lax.broadcasted_iota(jnp.int32, (x.shape[0], 1), 0))
            valid = row < batch                                  # (tile_b, 1)
            base = jnp.where(valid, base, 0.0)
        partial = jnp.sum(base, axis=0, keepdims=True)           # (1, P)
        if smooth_spine:
            sp12, sp23 = _spine_terms(x, jnp.float32(smooth_spine_loss_weight))
            if ragged:
                sp12 = jnp.where(valid, sp12, 0.0)
                sp23 = jnp.where(valid, sp23, 0.0)
            sp_total = jnp.sum(sp12) + jnp.sum(sp23)
            lane0 = jnp.where(
                lax.broadcasted_iota(jnp.int32, (1, x.shape[1]), 1) == 0,
                1.0, 0.0)
            partial = partial + sp_total * lane0
        out_ref[...] = partial[None]                             # (1, 1, P)

    return kernel


def _make_none_kernel(loss_weight, smooth_spine, smooth_spine_loss_weight):
    """Per-element kernel for reduction == 'none' (single concatenated store)."""

    def kernel(x_ref, out_ref):
        x = x_ref[...].astype(jnp.float32)                       # (tile_b, P)
        cols = []
        for idx, sign in zip(_IDX, _SIGN):
            v = x[:, idx:idx + 1] * jnp.float32(sign)
            cols.append((jnp.exp(v) - 1.0) ** 2)
        if smooth_spine:
            sp12, sp23 = _spine_terms(x, jnp.float32(smooth_spine_loss_weight))
            cols.append(sp12)
            cols.append(sp23)
        out_ref[...] = jnp.concatenate(cols, axis=1) * jnp.float32(loss_weight)

    return kernel


@functools.partial(
    jax.jit,
    static_argnames=('loss_weight', 'reduction', 'smooth_spine',
                     'smooth_spine_loss_weight'))
def joint_prior_loss(body_pose,
                     loss_weight=1.0,
                     reduction='mean',
                     smooth_spine=False,
                     smooth_spine_loss_weight=1.0):
    """Pallas TPU implementation of JointPriorLoss.forward (use_full_body=False)."""
    assert reduction in ('none', 'mean', 'sum')
    batch, pose_dim = body_pose.shape
    assert pose_dim >= 59, 'need at least 59 pose components (indices up to 58)'

    n_elem = 4 + (6 if smooth_spine else 0)
    tile_b = _pick_tile(batch)
    grid = (pl.cdiv(batch, tile_b),)

    if reduction in ('mean', 'sum'):
        kernel = _make_sum_kernel(batch, tile_b, smooth_spine,
                                  smooth_spine_loss_weight)
        partials = pl.pallas_call(
            kernel,
            grid=grid,
            in_specs=[pl.BlockSpec((tile_b, pose_dim), lambda i: (i, 0))],
            out_specs=pl.BlockSpec((1, 1, pose_dim), lambda i: (i, 0, 0)),
            out_shape=jax.ShapeDtypeStruct((grid[0], 1, pose_dim), jnp.float32),
            compiler_params=pltpu.CompilerParams(
                dimension_semantics=("parallel",)),
        )(body_pose)
        total = jnp.sum(partials) * jnp.float32(loss_weight)
        if reduction == 'mean':
            total = total / jnp.float32(batch * n_elem)
        return total

    # reduction == 'none'
    kernel = _make_none_kernel(loss_weight, smooth_spine,
                               smooth_spine_loss_weight)
    out = pl.pallas_call(
        kernel,
        grid=grid,
        in_specs=[pl.BlockSpec((tile_b, pose_dim), lambda i: (i, 0))],
        out_specs=pl.BlockSpec((tile_b, n_elem), lambda i: (i, 0)),
        out_shape=jax.ShapeDtypeStruct((batch, n_elem), jnp.float32),
        compiler_params=pltpu.CompilerParams(
            dimension_semantics=("parallel",)),
    )(body_pose)
    return out


def _reference(body_pose, loss_weight=1.0, reduction='mean',
               smooth_spine=False, smooth_spine_loss_weight=1.0):
    """Pure-JAX reference mirroring the PyTorch module."""
    x = body_pose.astype(jnp.float32)
    signs = jnp.asarray(_SIGN, dtype=jnp.float32)
    loss = (jnp.exp(x[:, list(_IDX)] * signs) - 1.0) ** 2
    if smooth_spine:
        s1 = x[:, _SPINE1]
        s2 = x[:, _SPINE2]
        s3 = x[:, _SPINE3]
        l12 = (jnp.exp(jax.nn.relu(-s1 * s2)) - 1.0) ** 2 * smooth_spine_loss_weight
        l23 = (jnp.exp(jax.nn.relu(-s2 * s3)) - 1.0) ** 2 * smooth_spine_loss_weight
        loss = jnp.concatenate([loss, l12, l23], axis=1)
    loss = loss_weight * loss
    if reduction == 'mean':
        return loss.mean()
    if reduction == 'sum':
        return loss.sum()
    return loss


if __name__ == '__main__':
    key = jax.random.PRNGKey(0)
    # batch=2, SMPL body pose: 23 joints * 3 axis-angle params = 69
    body_pose = 0.5 * jax.random.normal(key, (2, 69), dtype=jnp.float32)

    # Default config: reduction='mean', loss_weight=1.0, smooth_spine=False.
    out = jax.block_until_ready(joint_prior_loss(body_pose))
    ref = _reference(body_pose)
    assert jnp.allclose(out, ref, rtol=1e-5, atol=1e-6), (out, ref)

    # smooth_spine + sum path.
    out2 = jax.block_until_ready(
        joint_prior_loss(body_pose, loss_weight=2.0, reduction='sum',
                         smooth_spine=True, smooth_spine_loss_weight=0.5))
    ref2 = _reference(body_pose, loss_weight=2.0, reduction='sum',
                      smooth_spine=True, smooth_spine_loss_weight=0.5)
    assert jnp.allclose(out2, ref2, rtol=1e-5, atol=1e-6), (out2, ref2)

    # reduction='none' path (per-element output).
    out3 = jax.block_until_ready(
        joint_prior_loss(body_pose, reduction='none', smooth_spine=True))
    ref3 = _reference(body_pose, reduction='none', smooth_spine=True)
    assert jnp.allclose(out3, ref3, rtol=1e-5, atol=1e-6), (out3, ref3)

    print("KERNEL_OK")
</pallas_src>

<mosaic_0001>
module attributes {stable_mosaic.version = 11 : i64} {
  func.func @kernel(%arg0: i32, %arg1: memref<2x69xf32, #tpu.memory_space<vmem>>, %arg2: memref<1x1x69xf32, #tpu.memory_space<vmem>>) attributes {dimension_semantics = [#tpu.dimension_semantics<parallel>], iteration_bounds = array<i64: 1>, scalar_prefetch = 0 : i64, scratch_operands = 0 : i64, tpu.core_type = #tpu.core_type<tc>, window_params = [{transform_indices = @transform_0, window_bounds = array<i64: 2, 69>}, {transform_indices = @transform_1, window_bounds = array<i64: 1, 1, 69>}]} {
    %c0 = arith.constant 0 : index
    %c0_0 = arith.constant 0 : index
    %0 = vector.load %arg1[%c0, %c0_0] : memref<2x69xf32, #tpu.memory_space<vmem>>, vector<2x69xf32>
    %1 = tpu.iota {dimensions = array<i32: 1>} : vector<2x69xi32>
    %c55_i32 = arith.constant 55 : i32
    %2 = vector.broadcast %c55_i32 : i32 to vector<2x69xi32>
    %3 = arith.cmpi eq, %1, %2 : vector<2x69xi32>
    %cst = arith.constant 1.000000e+00 : f32
    %cst_1 = arith.constant 0.000000e+00 : f32
    %4 = vector.broadcast %cst : f32 to vector<2x69xf32>
    %5 = vector.broadcast %cst_1 : f32 to vector<2x69xf32>
    %6 = arith.select %3, %4, %5 : vector<2x69xi1>, vector<2x69xf32>
    %c58_i32 = arith.constant 58 : i32
    %7 = vector.broadcast %c58_i32 : i32 to vector<2x69xi32>
    %8 = arith.cmpi eq, %1, %7 : vector<2x69xi32>
    %c12_i32 = arith.constant 12 : i32
    %9 = vector.broadcast %c12_i32 : i32 to vector<2x69xi32>
    %10 = arith.cmpi eq, %1, %9 : vector<2x69xi32>
    %11 = arith.ori %8, %10 : vector<2x69xi1>
    %c15_i32 = arith.constant 15 : i32
    %12 = vector.broadcast %c15_i32 : i32 to vector<2x69xi32>
    %13 = arith.cmpi eq, %1, %12 : vector<2x69xi32>
    %14 = arith.ori %11, %13 : vector<2x69xi1>
    %cst_2 = arith.constant 1.000000e+00 : f32
    %cst_3 = arith.constant 0.000000e+00 : f32
    %15 = vector.broadcast %cst_2 : f32 to vector<2x69xf32>
    %16 = vector.broadcast %cst_3 : f32 to vector<2x69xf32>
    %17 = arith.select %14, %15, %16 : vector<2x69xi1>, vector<2x69xf32>
    %18 = arith.subf %6, %17 : vector<2x69xf32>
    %19 = arith.mulf %0, %18 : vector<2x69xf32>
    %20 = math.exp %19 : vector<2x69xf32>
    %cst_4 = arith.constant 1.000000e+00 : f32
    %21 = vector.broadcast %cst_4 : f32 to vector<2x69xf32>
    %22 = arith.subf %20, %21 : vector<2x69xf32>
    %23 = arith.mulf %22, %22 : vector<2x69xf32>
    %cst_5 = arith.constant dense<0.000000e+00> : vector<69xf32>
    %24 = vector.multi_reduction <add>, %23, %cst_5 [0] : vector<2x69xf32> to vector<69xf32>
    %25 = vector.shape_cast %24 : vector<69xf32> to vector<1x69xf32>
    %26 = vector.shape_cast %25 : vector<1x69xf32> to vector<1x1x69xf32>
    %c0_6 = arith.constant 0 : index
    %c0_7 = arith.constant 0 : index
    %c0_8 = arith.constant 0 : index
    %27 = vector.load %arg2[%c0_6, %c0_7, %c0_8] : memref<1x1x69xf32, #tpu.memory_space<vmem>>, vector<1x1x69xf32>
    tpu.vector_store %arg2[%c0_6, %c0_7, %c0_8], %26 {strides = array<i32>} : memref<1x1x69xf32, #tpu.memory_space<vmem>>, vector<1x1x69xf32>,
    return
  }
  func.func @transform_0(%arg0: i32) -> (i32, i32) {
    %c0_i32 = arith.constant 0 : i32
    %c0_i32_0 = arith.constant 0 : i32
    return %arg0, %c0_i32 : i32, i32
  }
  func.func @transform_1(%arg0: i32) -> (i32, i32, i32) {
    %c0_i32 = arith.constant 0 : i32
    %c0_i32_0 = arith.constant 0 : i32
    %c0_i32_1 = arith.constant 0 : i32
    return %arg0, %c0_i32, %c0_i32_0 : i32, i32, i32
  }
}

</mosaic_0001>

<llo_original>
// kernel: joint_prior_loss.1
$region0: #{joint_prior_loss.1}
  #allocation0 [shape = 'u32[]', space=smem, size = 0x4, offset = 0x4, fixed_abs, tag = 'smem constant byte address 0x4 - core index']
  #allocation1 [shape = 'u32[144,128]{1,0:T(1,128)}', space=vmem, size = 0x12000, scoped, tag = 'internal scratch']
  %s0 = inlined_call_operand.hbm [shape: f32[2,69], index: 0, kind: input, shape index: {}]
  %s1 = inlined_call_operand.vmem [shape: f32[1,1,69], index: 1, kind: output, shape index: {}]
  %s2 = sld [smem:[#allocation0]]
  $region18: #{joint_prior_loss.1} parent=0
    _
  %s4 = ssub.s32 1, %s2
  %s5 = scalar_select 0, %s4, %s2
  $region1: #{joint_prior_loss.1} parent=0
    #allocation2 [shape = 'u8[1024]{0}', space=vmem, size = 0x400, scoped, tag = 'input window, operand 0, single buffered']
    #allocation3 [shape = 's32[1]{0}', space=sflag, size = 0x4, scoped, tag = 'scoped memory for joint_prior_loss.1']
    %6 = vsyncpa [#allocation3], 0
    // Predicated region
    $region2: #{joint_prior_loss.1} parent=1 // pred_check
      _
    $region3: #{joint_prior_loss.1} parent=1 // pred_check_branch
      %8 = sbr.rel (0) target = $region5
    $region4: #{joint_prior_loss.1} parent=1 // pred_region
      %s10 = ssub.s32 32, 32
      %11 = vsyncadd [#allocation3], %s10
      %s13 = sshll.u32 [#allocation2], 4
      %s14 = int_to_ptr.vmem [resolvable:$true] %s13
      %16 = dma.hbm_to_vmem [thread:$0]  %s0, 32, %s14, [#allocation3]
    $region5: #{joint_prior_loss.1} parent=1 // pred_fallthru
      _
    // Predicated region
    $region6: #{joint_prior_loss.1} parent=1 // pred_check
      _
    $region7: #{joint_prior_loss.1} parent=1 // pred_check_branch
      %18 = sbr.rel (0) target = $region9
    $region8: #{joint_prior_loss.1} parent=1 // pred_region
      %19 = dma.done [#allocation3], 32
    $region9: #{joint_prior_loss.1} parent=1 // pred_fallthru
      _
    %v20 = vld [vmem:[#allocation2] sm:$0x3]
    %v21 = vlaneseq
    %v22 = vand.u32 %v21, 127
    %vm23 = vcmp.eq.s32.totalorder %v22, 55
    %v24 = vsel %vm23, 1.0, 0.0
    %vm25 = vcmp.eq.s32.totalorder %v22, 58
    %vm26 = vcmp.eq.s32.totalorder %v22, 12
    %vm27 = vmor %vm25, %vm26
    %vm28 = vcmp.eq.s32.totalorder %v22, 15
    %vm29 = vmor %vm27, %vm28
    %v30 = vsel %vm29, 1.0, 0.0
    %v31 = vsub.f32 %v24, %v30
    %v32 = vmul.f32 %v20, %v31
    %v33 = vmul.f32 %v32, 1.442695
    %v34 = vpow.pop %v33
    %v35 = vsub.f32 %v34, 1.0
    %v36 = vmul.f32 %v35, %v35
    %vm37 = vcmask 558080
    %v38 = vsel %vm37, %v36, 0.0
    %v39 = vrot.slane %v38, 4
    %v40 = vadd.f32 %v38, %v39
    %v41 = vrot.slane %v40, 2
    %v42 = vadd.f32 %v40, %v41
    %v43 = vrot.slane %v42, 1
    %v44 = vadd.f32 %v42, %v43
    %vm45 = vcmask 557056
    %46 = vst.msk [vmem:[%s1] sm:$0x1] %vm45, %v44
    // Predicated region
    $region10: #{joint_prior_loss.1} parent=1 // pred_check
      _
    $region11: #{joint_prior_loss.1} parent=1 // pred_check_branch
      %48 = sbr.rel (0) target = $region13
    $region12: #{joint_prior_loss.1} parent=1 // pred_region
      _
    $region13: #{joint_prior_loss.1} parent=1 // pred_fallthru
      _
    // Predicated region
    $region14: #{joint_prior_loss.1} parent=1 // pred_check
      _
    $region15: #{joint_prior_loss.1} parent=1 // pred_check_branch
      %50 = sbr.rel (0) target = $region17
    $region16: #{joint_prior_loss.1} parent=1 // pred_region
      _
    $region17: #{joint_prior_loss.1} parent=1 // pred_fallthru
      _
    %51 = vsyncpa [#allocation3], 1

</llo_original>
